<compile_context>
chip_gen: v7x
topology: tpu7x:2x2x1
jax: 0.10.0
libtpu: 0.0.40
codegen_flags: <defaults>
</compile_context>

<pallas_src>
import jax
import jax.numpy as jnp
import numpy as np
from jax.experimental import pallas as pl
from jax.experimental.pallas import tpu as pltpu

_LANE = 128
_TILE_B_MAX = 512  # large-batch tile (single-TC parts want fewer, fatter steps)


def _round_up(x, m):
    return ((x + m - 1) // m) * m


# ----------------------------------------------------------------------------
# Fused kernel: [LSTM layers (seq_len == 1)] -> Q-MLP
# ----------------------------------------------------------------------------
def _make_fused_kernel(nlayers, use_lstm, has_state, hdim_p):
    def kernel(*refs):
        idx = 0
        obs_ref = refs[idx]; idx += 1
        act_ref = refs[idx]; idx += 1
        if use_lstm:
            if has_state:
                h0_ref = refs[idx]; idx += 1
                c0_ref = refs[idx]; idx += 1
            lstm_refs = []
            for _ in range(nlayers):
                if has_state:
                    lstm_refs.append((refs[idx], refs[idx + 1], refs[idx + 2]))
                    idx += 3
                else:  # no carried state -> w_hh is never needed
                    lstm_refs.append((refs[idx], refs[idx + 1]))
                    idx += 2
            w1_ref, b1_ref, w2_ref, b2_ref, w3_ref, b3_ref = refs[idx:idx + 6]
            idx += 6
        else:
            (w1f_ref, w1a_ref, b1_ref, w2_ref, b2_ref,
             w3_ref, b3_ref) = refs[idx:idx + 7]
            idx += 7
        q_ref = refs[idx]; idx += 1
        if use_lstm:
            h_out_ref = refs[idx]; idx += 1
            c_out_ref = refs[idx]; idx += 1

        x = obs_ref[...]                                   # f32 [B, feat]

        if use_lstm:
            Hp = hdim_p
            # Layers unrolled at trace time (nlayers static & small).
            for layer in range(nlayers):
                if has_state:
                    w_ih_ref, w_hh_ref, b_ref = lstm_refs[layer]
                    h_prev = h0_ref[layer]                 # f32 [B, Hp]
                    c_prev = c0_ref[layer]                 # f32 [B, Hp]
                    pre = (jnp.dot(x.astype(jnp.bfloat16), w_ih_ref[...],
                                   preferred_element_type=jnp.float32)
                           + jnp.dot(h_prev.astype(jnp.bfloat16), w_hh_ref[...],
                                     preferred_element_type=jnp.float32)
                           + b_ref[...])                   # f32 [B, 4*Hp]
                else:
                    w_ih_ref, b_ref = lstm_refs[layer]
                    pre = (jnp.dot(x.astype(jnp.bfloat16), w_ih_ref[...],
                                   preferred_element_type=jnp.float32)
                           + b_ref[...])                   # f32 [B, 4*Hp]

                # PyTorch gate order i|f|g|o; each gate is a 128-aligned block.
                i_g = jax.nn.sigmoid(pre[:, 0 * Hp:1 * Hp])
                g_g = jnp.tanh(pre[:, 2 * Hp:3 * Hp])
                o_g = jax.nn.sigmoid(pre[:, 3 * Hp:4 * Hp])
                if has_state:
                    f_g = jax.nn.sigmoid(pre[:, 1 * Hp:2 * Hp])
                    c_new = f_g * c_prev + i_g * g_g
                else:
                    c_new = i_g * g_g                      # c_prev == 0
                h_new = o_g * jnp.tanh(c_new)
                h_out_ref[layer] = h_new                   # lane-dense [B, Hp]
                c_out_ref[layer] = c_new
                x = h_new                                  # feeds next layer

            # fc1 with the torch.cat folded into ONE dot: feat is Hp lanes
            # (multiple of 128) so this minor-dim concat is lane-aligned.
            xin = jnp.concatenate(
                [x.astype(jnp.bfloat16), act_ref[...].astype(jnp.bfloat16)],
                axis=-1)                                   # [B, Hp + act]
            x1 = (jnp.dot(xin, w1_ref[...], preferred_element_type=jnp.float32)
                  + b1_ref[...])
        else:
            # obs is not lane aligned -> keep the two column-block dots.
            x1 = (jnp.dot(x.astype(jnp.bfloat16), w1f_ref[...],
                          preferred_element_type=jnp.float32)
                  + jnp.dot(act_ref[...].astype(jnp.bfloat16), w1a_ref[...],
                            preferred_element_type=jnp.float32)
                  + b1_ref[...])

        x1 = jnp.maximum(x1, 0.0)
        x2 = (jnp.dot(x1.astype(jnp.bfloat16), w2_ref[...],
                      preferred_element_type=jnp.float32) + b2_ref[...])
        x2 = jnp.maximum(x2, 0.0)
        # fc3 (256 -> 1): VPU multiply + lane reduction (keeps the MXU free).
        q_ref[...] = jnp.sum(x2 * w3_ref[...], axis=-1, keepdims=True) + b3_ref[...]

    return kernel


# ----------------------------------------------------------------------------
# Parameter construction (deterministic, PyTorch-style uniform init).
# Matmul weights are stored pre-packed ([in, out], gates fused & 128-aligned)
# and in bf16; biases and the fc3 row stay f32 (VPU path).
# ----------------------------------------------------------------------------
def _uniform(key, shape, bound):
    return jax.random.uniform(key, shape, jnp.float32, -bound, bound)


def init_soft_q_params(key, obs_dim, act_dim, hdim, nlayers, use_lstm):
    hdim_p = _round_up(hdim, _LANE) if use_lstm else 0
    params = {"use_lstm": use_lstm, "hdim": hdim, "hdim_p": hdim_p,
              "nlayers": nlayers if use_lstm else 0}
    keys = jax.random.split(key, 4 * max(nlayers, 1) + 6)
    ki = 0

    if use_lstm:
        lstm_layers = []
        bound = 1.0 / np.sqrt(hdim)
        for layer in range(nlayers):
            real_in = obs_dim if layer == 0 else hdim
            in_dim = obs_dim if layer == 0 else hdim_p     # layer>0 sees padded h
            w_ih = _uniform(keys[ki], (4 * hdim, real_in), bound); ki += 1
            w_hh = _uniform(keys[ki], (4 * hdim, hdim), bound);    ki += 1
            b_ih = _uniform(keys[ki], (4 * hdim,), bound);         ki += 1
            b_hh = _uniform(keys[ki], (4 * hdim,), bound);         ki += 1
            # PyTorch rows are [i|f|g|o] blocks of size H; transpose each block
            # and pack it into a 128-aligned column block of one fused weight.
            w_ih_g = jnp.transpose(w_ih.reshape(4, hdim, real_in), (0, 2, 1))
            w_hh_g = jnp.transpose(w_hh.reshape(4, hdim, hdim), (0, 2, 1))
            bsum = (b_ih + b_hh).reshape(4, hdim)
            W_ih = jnp.zeros((in_dim, 4 * hdim_p), jnp.float32)
            W_hh = jnp.zeros((hdim_p, 4 * hdim_p), jnp.float32)
            b = jnp.zeros((1, 4 * hdim_p), jnp.float32)
            for g in range(4):
                c0, c1 = g * hdim_p, g * hdim_p + hdim
                W_ih = W_ih.at[:real_in, c0:c1].set(w_ih_g[g])
                W_hh = W_hh.at[:hdim, c0:c1].set(w_hh_g[g])
                b = b.at[0, c0:c1].set(bsum[g])
            lstm_layers.append({
                "w_ih": W_ih.astype(jnp.bfloat16),         # [in,  4*Hp]
                "w_hh": W_hh.astype(jnp.bfloat16),         # [Hp,  4*Hp]
                "b": b,                                    # [1,   4*Hp] f32
            })
        params["lstm"] = lstm_layers
        feat_dim = hdim
    else:
        feat_dim = obs_dim

    in_fc = feat_dim + act_dim

    def linear(kw, kb, fan_in, fan_out):
        bound = 1.0 / np.sqrt(fan_in)
        w = _uniform(kw, (fan_out, fan_in), bound)
        b = _uniform(kb, (fan_out,), bound)
        return jnp.transpose(w), b.reshape(1, fan_out)     # [in, out], [1, out]

    w1_t, b1 = linear(keys[ki], keys[ki + 1], in_fc, 256); ki += 2
    w2_t, b2 = linear(keys[ki], keys[ki + 1], 256, 256);   ki += 2
    w3_t, b3 = linear(keys[ki], keys[ki + 1], 256, 1);     ki += 2

    if use_lstm:
        # One fc1 weight block matching the in-kernel concat [feat_pad | act].
        W1 = jnp.zeros((hdim_p + act_dim, 256), jnp.float32)
        W1 = W1.at[:hdim, :].set(w1_t[:hdim, :])           # feat columns
        W1 = W1.at[hdim_p:, :].set(w1_t[hdim:, :])         # act columns
        params["w1"] = W1.astype(jnp.bfloat16)
    else:
        params["w1_feat"] = w1_t[:feat_dim, :].astype(jnp.bfloat16)
        params["w1_act"] = w1_t[feat_dim:, :].astype(jnp.bfloat16)
    params["b1"] = b1
    params["w2"] = w2_t.astype(jnp.bfloat16)
    params["b2"] = b2
    params["w3"] = jnp.transpose(w3_t)                     # [1, 256] f32 (VPU)
    params["b3"] = b3                                      # [1, 1]
    params["obs_dim"] = obs_dim
    params["act_dim"] = act_dim
    return params


# ----------------------------------------------------------------------------
# Forward pass (mirrors SoftQNetwork.forward) -- single fused pallas_call.
# ----------------------------------------------------------------------------
def soft_q_forward(params, obs, act, hx=None, tile_b=None):
    use_lstm = params["use_lstm"]
    obs = obs.astype(jnp.float32)
    act = act.astype(jnp.float32)
    B, obs_dim = obs.shape
    act_dim = act.shape[1]
    hdim, hdim_p, nlayers = params["hdim"], params["hdim_p"], params["nlayers"]

    has_state = False
    if use_lstm and hx is not None and hx[0].shape[1] == B:
        has_state = True
        h0, c0 = hx
        h0 = h0.astype(jnp.float32)
        c0 = c0.astype(jnp.float32)
        if hdim_p != hdim:  # pad state feature dim to the lane-dense width
            padw = [(0, 0), (0, 0), (0, hdim_p - hdim)]
            h0 = jnp.pad(h0, padw)
            c0 = jnp.pad(c0, padw)
    # else: zero state is built in VMEM inside the kernel -- no HBM round trip.

    # --- batch tiling --------------------------------------------------------
    if tile_b is None:
        if B < 16:
            tile_b = B                       # single full-extent block
        else:
            # >=2 grid steps so ("parallel",) can shard across the 2 TCs of a
            # v7x chip; on 1-TC v5e/v6e the extra step is ~0.35us. Large B
            # uses fat 512-row tiles to amortize per-step overhead.
            n_tiles = max(2, -(-B // _TILE_B_MAX))
            tile_b = _round_up(-(-B // n_tiles), 8)
    b_pad = _round_up(B, tile_b)
    grid = (b_pad // tile_b,)

    def pad_b(x, axis):
        if b_pad == B:
            return x
        pad = [(0, 0)] * x.ndim
        pad[axis] = (0, b_pad - B)
        return jnp.pad(x, pad)

    inputs = [pad_b(obs, 0), pad_b(act, 0)]
    in_specs = [
        pl.BlockSpec((tile_b, obs_dim), lambda i: (i, 0)),
        pl.BlockSpec((tile_b, act_dim), lambda i: (i, 0)),
    ]

    def resident_spec(w):  # constant block index -> stays VMEM-resident
        return pl.BlockSpec(w.shape, lambda i, _nd=w.ndim: (0,) * _nd)

    if use_lstm:
        if has_state:
            inputs += [pad_b(h0, 1), pad_b(c0, 1)]
            in_specs += [
                pl.BlockSpec((nlayers, tile_b, hdim_p), lambda i: (0, i, 0)),
                pl.BlockSpec((nlayers, tile_b, hdim_p), lambda i: (0, i, 0)),
            ]
        for lp in params["lstm"]:
            ws = (lp["w_ih"], lp["w_hh"], lp["b"]) if has_state else (lp["w_ih"], lp["b"])
            for w in ws:
                inputs.append(w)
                in_specs.append(resident_spec(w))
        fc_names = ("w1", "b1", "w2", "b2", "w3", "b3")
    else:
        fc_names = ("w1_feat", "w1_act", "b1", "w2", "b2", "w3", "b3")
    for name in fc_names:
        w = params[name]
        inputs.append(w)
        in_specs.append(resident_spec(w))

    out_shapes = [jax.ShapeDtypeStruct((b_pad, 1), jnp.float32)]
    out_specs = [pl.BlockSpec((tile_b, 1), lambda i: (i, 0))]
    if use_lstm:
        # Lane-dense (Hp = k*128) h/c writeback; sliced back to hdim below.
        out_shapes += [jax.ShapeDtypeStruct((nlayers, b_pad, hdim_p), jnp.float32)] * 2
        out_specs += [pl.BlockSpec((nlayers, tile_b, hdim_p), lambda i: (0, i, 0))] * 2

    # --- advisory cost estimate + explicit VMEM limit ------------------------
    flops = 0
    if use_lstm:
        for layer in range(nlayers):
            k_in = obs_dim if layer == 0 else hdim_p
            k_tot = k_in + (hdim_p if has_state else 0)
            flops += 2 * b_pad * k_tot * 4 * hdim_p
        fc1_k = hdim_p + act_dim
        transcendentals = 5 * nlayers * b_pad * hdim_p
    else:
        fc1_k = obs_dim + act_dim
        transcendentals = 0
    flops += 2 * b_pad * fc1_k * 256 + 2 * b_pad * 256 * 256 + 2 * b_pad * 256
    bytes_accessed = int(sum(int(np.prod(x.shape)) * jnp.dtype(x.dtype).itemsize
                             for x in inputs)
                         + sum(int(np.prod(s.shape)) * jnp.dtype(s.dtype).itemsize
                               for s in out_shapes))

    outs = pl.pallas_call(
        _make_fused_kernel(nlayers, use_lstm, has_state, hdim_p),
        out_shape=tuple(out_shapes),
        grid_spec=pltpu.PrefetchScalarGridSpec(
            num_scalar_prefetch=0,
            grid=grid,
            in_specs=in_specs,
            out_specs=tuple(out_specs),
        ),
        compiler_params=pltpu.CompilerParams(
            dimension_semantics=("parallel",),
            vmem_limit_bytes=32 * 1024 * 1024,
        ),
        cost_estimate=pl.CostEstimate(
            flops=int(flops),
            transcendentals=int(transcendentals),
            bytes_accessed=bytes_accessed,
        ),
    )(*inputs)

    q = outs[0][:B]
    if use_lstm:
        new_hx = (outs[1][:, :B, :hdim], outs[2][:, :B, :hdim])
    else:
        new_hx = hx
    return q, new_hx


# ----------------------------------------------------------------------------
# Pure-JAX reference (f32 math on the same bf16-rounded, packed weights).
# ----------------------------------------------------------------------------
def soft_q_reference(params, obs, act, hx=None):
    B = obs.shape[0]
    obs = obs.astype(jnp.float32)
    act = act.astype(jnp.float32)
    if params["use_lstm"]:
        hdim, hdim_p, nlayers = params["hdim"], params["hdim_p"], params["nlayers"]
        if hx is None or hx[0].shape[1] != B:
            h = jnp.zeros((nlayers, B, hdim), jnp.float32)
            c = jnp.zeros_like(h)
        else:
            h, c = hx
        x = obs
        h_new, c_new = [], []
        for layer in range(nlayers):
            lp = params["lstm"][layer]
            w_ih = lp["w_ih"].astype(jnp.float32)
            w_hh = lp["w_hh"].astype(jnp.float32)
            b = lp["b"]
            h_pad = jnp.pad(h[layer], ((0, 0), (0, hdim_p - hdim)))
            pre = x @ w_ih + h_pad @ w_hh + b
            gates = [pre[:, g * hdim_p:g * hdim_p + hdim] for g in range(4)]
            i_g = jax.nn.sigmoid(gates[0]); f_g = jax.nn.sigmoid(gates[1])
            g_g = jnp.tanh(gates[2]);       o_g = jax.nn.sigmoid(gates[3])
            c_n = f_g * c[layer] + i_g * g_g
            h_n = o_g * jnp.tanh(c_n)
            h_new.append(h_n); c_new.append(c_n)
            x = jnp.pad(h_n, ((0, 0), (0, hdim_p - hdim)))
        new_hx = (jnp.stack(h_new), jnp.stack(c_new))
        x_in = jnp.concatenate([x, act], axis=-1)
        x1 = jnp.maximum(x_in @ params["w1"].astype(jnp.float32) + params["b1"], 0.0)
    else:
        new_hx = hx
        x1 = jnp.maximum(obs @ params["w1_feat"].astype(jnp.float32)
                         + act @ params["w1_act"].astype(jnp.float32)
                         + params["b1"], 0.0)
    x2 = jnp.maximum(x1 @ params["w2"].astype(jnp.float32) + params["b2"], 0.0)
    q = jnp.sum(x2 * params["w3"], axis=-1, keepdims=True) + params["b3"]
    return q, new_hx


# ----------------------------------------------------------------------------
if __name__ == "__main__":
    batch, obs_dim, act_dim, hdim, nlayers = 2, 16, 4, 32, 1

    key = jax.random.PRNGKey(0)
    k_param, k_obs, k_act, k_obs2, k_act2, k_param2 = jax.random.split(key, 6)

    params = init_soft_q_params(k_param, obs_dim, act_dim, hdim, nlayers,
                                use_lstm=True)
    obs = jax.random.normal(k_obs, (batch, obs_dim), jnp.float32)
    act = jax.random.normal(k_act, (batch, act_dim), jnp.float32)

    # --- step 1: hx=None -> zero state built in VMEM (no h0/c0 HBM traffic) --
    q, hx = soft_q_forward(params, obs, act, hx=None)
    q = jax.block_until_ready(q)
    jax.block_until_ready(hx)
    assert q.shape == (batch, 1)
    assert hx[0].shape == (nlayers, batch, hdim)
    assert bool(jnp.all(jnp.isfinite(q)))

    q_ref, hx_ref = soft_q_reference(params, obs, act, hx=None)
    np.testing.assert_allclose(np.asarray(q), np.asarray(q_ref),
                               atol=5e-2, rtol=5e-2)
    np.testing.assert_allclose(np.asarray(hx[0]), np.asarray(hx_ref[0]),
                               atol=5e-2, rtol=5e-2)
    np.testing.assert_allclose(np.asarray(hx[1]), np.asarray(hx_ref[1]),
                               atol=5e-2, rtol=5e-2)

    # --- step 2: carried state (exercises the has_state kernel variant) ------
    q2, hx2 = soft_q_forward(params, obs, act, hx=hx)
    jax.block_until_ready(q2)
    q2_ref, _ = soft_q_reference(params, obs, act, hx=hx)
    np.testing.assert_allclose(np.asarray(q2), np.asarray(q2_ref),
                               atol=5e-2, rtol=5e-2)

    # --- larger batch: exercises the multi-tile (>=2 step) grid + padding ----
    big_b = 300
    obs2 = jax.random.normal(k_obs2, (big_b, obs_dim), jnp.float32)
    act2 = jax.random.normal(k_act2, (big_b, act_dim), jnp.float32)
    q3, hx3 = soft_q_forward(params, obs2, act2, hx=None)
    jax.block_until_ready(q3)
    assert q3.shape == (big_b, 1)
    assert hx3[0].shape == (nlayers, big_b, hdim)
    assert bool(jnp.all(jnp.isfinite(q3)))
    q3_ref, _ = soft_q_reference(params, obs2, act2, hx=None)
    np.testing.assert_allclose(np.asarray(q3), np.asarray(q3_ref),
                               atol=5e-2, rtol=5e-2)

    # --- non-LSTM variant (feat = obs) ----------------------------------------
    params_mlp = init_soft_q_params(k_param2, obs_dim, act_dim, hdim, nlayers,
                                    use_lstm=False)
    q4, _ = soft_q_forward(params_mlp, obs, act, hx=None)
    jax.block_until_ready(q4)
    q4_ref, _ = soft_q_reference(params_mlp, obs, act, hx=None)
    np.testing.assert_allclose(np.asarray(q4), np.asarray(q4_ref),
                               atol=5e-2, rtol=5e-2)

    print("KERNEL_OK")
</pallas_src>

<mosaic_0001>
module attributes {stable_mosaic.version = 11 : i64} {
  func.func @kernel(%arg0: i32, %arg1: memref<2x16xf32, #tpu.memory_space<vmem>>, %arg2: memref<2x4xf32, #tpu.memory_space<vmem>>, %arg3: memref<16x512xbf16, #tpu.memory_space<vmem>>, %arg4: memref<1x512xf32, #tpu.memory_space<vmem>>, %arg5: memref<132x256xbf16, #tpu.memory_space<vmem>>, %arg6: memref<1x256xf32, #tpu.memory_space<vmem>>, %arg7: memref<256x256xbf16, #tpu.memory_space<vmem>>, %arg8: memref<1x256xf32, #tpu.memory_space<vmem>>, %arg9: memref<1x256xf32, #tpu.memory_space<vmem>>, %arg10: memref<1x1xf32, #tpu.memory_space<vmem>>, %arg11: memref<2x1xf32, #tpu.memory_space<vmem>>, %arg12: memref<1x2x128xf32, #tpu.memory_space<vmem>>, %arg13: memref<1x2x128xf32, #tpu.memory_space<vmem>>) attributes {dimension_semantics = [#tpu.dimension_semantics<parallel>], iteration_bounds = array<i64: 1>, scalar_prefetch = 0 : i64, scratch_operands = 0 : i64, tpu.core_type = #tpu.core_type<tc>, window_params = [{transform_indices = @transform_0, window_bounds = array<i64: 2, 16>}, {transform_indices = @transform_1, window_bounds = array<i64: 2, 4>}, {pipeline_mode = #tpu.pipeline_mode<synchronous>, transform_indices = @transform_2, window_bounds = array<i64: 16, 512>}, {pipeline_mode = #tpu.pipeline_mode<synchronous>, transform_indices = @transform_3, window_bounds = array<i64: 1, 512>}, {pipeline_mode = #tpu.pipeline_mode<synchronous>, transform_indices = @transform_4, window_bounds = array<i64: 132, 256>}, {pipeline_mode = #tpu.pipeline_mode<synchronous>, transform_indices = @transform_5, window_bounds = array<i64: 1, 256>}, {pipeline_mode = #tpu.pipeline_mode<synchronous>, transform_indices = @transform_6, window_bounds = array<i64: 256, 256>}, {pipeline_mode = #tpu.pipeline_mode<synchronous>, transform_indices = @transform_7, window_bounds = array<i64: 1, 256>}, {pipeline_mode = #tpu.pipeline_mode<synchronous>, transform_indices = @transform_8, window_bounds = array<i64: 1, 256>}, {pipeline_mode = #tpu.pipeline_mode<synchronous>, transform_indices = @transform_9, window_bounds = array<i64: 1, 1>}, {transform_indices = @transform_10, window_bounds = array<i64: 2, 1>}, {transform_indices = @transform_11, window_bounds = array<i64: 1, 2, 128>}, {transform_indices = @transform_12, window_bounds = array<i64: 1, 2, 128>}]} {
    %c0 = arith.constant 0 : index
    %c0_0 = arith.constant 0 : index
    %0 = vector.load %arg1[%c0, %c0_0] : memref<2x16xf32, #tpu.memory_space<vmem>>, vector<2x16xf32>
    %1 = arith.truncf %0 : vector<2x16xf32> to vector<2x16xbf16>
    %c0_1 = arith.constant 0 : index
    %c0_2 = arith.constant 0 : index
    %2 = vector.load %arg3[%c0_1, %c0_2] : memref<16x512xbf16, #tpu.memory_space<vmem>>, vector<16x512xbf16>
    %cst = arith.constant dense<0.000000e+00> : vector<2x512xf32>
    %3 = tpu.matmul %1, %2, %cst {dimension_numbers = #tpu.dot_dimension_numbers<[1], [0], [0], [1], [0, 0, 1, 1], [], []>} : vector<2x16xbf16>, vector<16x512xbf16>, vector<2x512xf32> -> vector<2x512xf32>
    %c0_3 = arith.constant 0 : index
    %c0_4 = arith.constant 0 : index
    %4 = vector.load %arg4[%c0_3, %c0_4] : memref<1x512xf32, #tpu.memory_space<vmem>>, vector<1x512xf32>
    %5 = vector.broadcast %4 : vector<1x512xf32> to vector<2x512xf32>
    %6 = arith.addf %3, %5 : vector<2x512xf32>
    %7 = vector.extract_strided_slice %6 {offsets = [0, 0], sizes = [2, 128], strides = [1, 1]} : vector<2x512xf32> to vector<2x128xf32>
    %8 = arith.negf %7 : vector<2x128xf32>
    %9 = math.exp %8 : vector<2x128xf32>
    %cst_5 = arith.constant 1.000000e+00 : f32
    %10 = vector.broadcast %cst_5 : f32 to vector<2x128xf32>
    %11 = arith.addf %10, %9 : vector<2x128xf32>
    %12 = arith.divf %10, %11 : vector<2x128xf32>
    %13 = vector.extract_strided_slice %6 {offsets = [0, 256], sizes = [2, 128], strides = [1, 1]} : vector<2x512xf32> to vector<2x128xf32>
    %14 = math.tanh %13 : vector<2x128xf32>
    %15 = vector.extract_strided_slice %6 {offsets = [0, 384], sizes = [2, 128], strides = [1, 1]} : vector<2x512xf32> to vector<2x128xf32>
    %16 = arith.negf %15 : vector<2x128xf32>
    %17 = math.exp %16 : vector<2x128xf32>
    %cst_6 = arith.constant 1.000000e+00 : f32
    %18 = vector.broadcast %cst_6 : f32 to vector<2x128xf32>
    %19 = arith.addf %18, %17 : vector<2x128xf32>
    %20 = arith.divf %18, %19 : vector<2x128xf32>
    %21 = arith.mulf %12, %14 : vector<2x128xf32>
    %22 = math.tanh %21 : vector<2x128xf32>
    %23 = arith.mulf %20, %22 : vector<2x128xf32>
    %c0_7 = arith.constant 0 : index
    %c0_8 = arith.constant 0 : index
    %c0_9 = arith.constant 0 : index
    %24 = vector.load %arg12[%c0_7, %c0_8, %c0_9] : memref<1x2x128xf32, #tpu.memory_space<vmem>>, vector<1x2x128xf32>
    %25 = vector.shape_cast %24 : vector<1x2x128xf32> to vector<2x128xf32>
    %26 = vector.shape_cast %23 : vector<2x128xf32> to vector<1x2x128xf32>
    tpu.vector_store %arg12[%c0_7, %c0_8, %c0_9], %26 {strides = array<i32>} : memref<1x2x128xf32, #tpu.memory_space<vmem>>, vector<1x2x128xf32>,
    %c0_10 = arith.constant 0 : index
    %c0_11 = arith.constant 0 : index
    %c0_12 = arith.constant 0 : index
    %27 = vector.load %arg13[%c0_10, %c0_11, %c0_12] : memref<1x2x128xf32, #tpu.memory_space<vmem>>, vector<1x2x128xf32>
    %28 = vector.shape_cast %27 : vector<1x2x128xf32> to vector<2x128xf32>
    %29 = vector.shape_cast %21 : vector<2x128xf32> to vector<1x2x128xf32>
    tpu.vector_store %arg13[%c0_10, %c0_11, %c0_12], %29 {strides = array<i32>} : memref<1x2x128xf32, #tpu.memory_space<vmem>>, vector<1x2x128xf32>,
    %30 = arith.truncf %23 : vector<2x128xf32> to vector<2x128xbf16>
    %c0_13 = arith.constant 0 : index
    %c0_14 = arith.constant 0 : index
    %31 = vector.load %arg2[%c0_13, %c0_14] : memref<2x4xf32, #tpu.memory_space<vmem>>, vector<2x4xf32>
    %32 = arith.truncf %31 : vector<2x4xf32> to vector<2x4xbf16>
    %33 = tpu.concatenate %30, %32 in 1 : vector<2x128xbf16>, vector<2x4xbf16> -> vector<2x132xbf16>
    %c0_15 = arith.constant 0 : index
    %c0_16 = arith.constant 0 : index
    %34 = vector.load %arg5[%c0_15, %c0_16] : memref<132x256xbf16, #tpu.memory_space<vmem>>, vector<132x256xbf16>
    %cst_17 = arith.constant dense<0.000000e+00> : vector<2x256xf32>
    %35 = tpu.matmul %33, %34, %cst_17 {dimension_numbers = #tpu.dot_dimension_numbers<[1], [0], [0], [1], [0, 0, 1, 1], [], []>} : vector<2x132xbf16>, vector<132x256xbf16>, vector<2x256xf32> -> vector<2x256xf32>
    %c0_18 = arith.constant 0 : index
    %c0_19 = arith.constant 0 : index
    %36 = vector.load %arg6[%c0_18, %c0_19] : memref<1x256xf32, #tpu.memory_space<vmem>>, vector<1x256xf32>
    %37 = vector.broadcast %36 : vector<1x256xf32> to vector<2x256xf32>
    %38 = arith.addf %35, %37 : vector<2x256xf32>
    %cst_20 = arith.constant 0.000000e+00 : f32
    %39 = vector.broadcast %cst_20 : f32 to vector<2x256xf32>
    %40 = arith.maximumf %38, %39 : vector<2x256xf32>
    %41 = arith.truncf %40 : vector<2x256xf32> to vector<2x256xbf16>
    %c0_21 = arith.constant 0 : index
    %c0_22 = arith.constant 0 : index
    %42 = vector.load %arg7[%c0_21, %c0_22] : memref<256x256xbf16, #tpu.memory_space<vmem>>, vector<256x256xbf16>
    %cst_23 = arith.constant dense<0.000000e+00> : vector<2x256xf32>
    %43 = tpu.matmul %41, %42, %cst_23 {dimension_numbers = #tpu.dot_dimension_numbers<[1], [0], [0], [1], [0, 0, 1, 1], [], []>} : vector<2x256xbf16>, vector<256x256xbf16>, vector<2x256xf32> -> vector<2x256xf32>
    %c0_24 = arith.constant 0 : index
    %c0_25 = arith.constant 0 : index
    %44 = vector.load %arg8[%c0_24, %c0_25] : memref<1x256xf32, #tpu.memory_space<vmem>>, vector<1x256xf32>
    %45 = vector.broadcast %44 : vector<1x256xf32> to vector<2x256xf32>
    %46 = arith.addf %43, %45 : vector<2x256xf32>
    %cst_26 = arith.constant 0.000000e+00 : f32
    %47 = vector.broadcast %cst_26 : f32 to vector<2x256xf32>
    %48 = arith.maximumf %46, %47 : vector<2x256xf32>
    %c0_27 = arith.constant 0 : index
    %c0_28 = arith.constant 0 : index
    %49 = vector.load %arg9[%c0_27, %c0_28] : memref<1x256xf32, #tpu.memory_space<vmem>>, vector<1x256xf32>
    %50 = vector.broadcast %49 : vector<1x256xf32> to vector<2x256xf32>
    %51 = arith.mulf %48, %50 : vector<2x256xf32>
    %cst_29 = arith.constant dense<0.000000e+00> : vector<2xf32>
    %52 = vector.multi_reduction <add>, %51, %cst_29 [1] : vector<2x256xf32> to vector<2xf32>
    %53 = vector.shape_cast %52 : vector<2xf32> to vector<2x1xf32>
    %c0_30 = arith.constant 0 : index
    %c0_31 = arith.constant 0 : index
    %54 = vector.load %arg10[%c0_30, %c0_31] : memref<1x1xf32, #tpu.memory_space<vmem>>, vector<1x1xf32>
    %55 = vector.broadcast %54 : vector<1x1xf32> to vector<2x1xf32>
    %56 = arith.addf %53, %55 : vector<2x1xf32>
    %c0_32 = arith.constant 0 : index
    %c0_33 = arith.constant 0 : index
    %57 = vector.load %arg11[%c0_32, %c0_33] : memref<2x1xf32, #tpu.memory_space<vmem>>, vector<2x1xf32>
    tpu.vector_store %arg11[%c0_32, %c0_33], %56 {strides = array<i32>} : memref<2x1xf32, #tpu.memory_space<vmem>>, vector<2x1xf32>,
    return
  }
  func.func @transform_0(%arg0: i32) -> (i32, i32) {
    %c0_i32 = arith.constant 0 : i32
    %c0_i32_0 = arith.constant 0 : i32
    return %arg0, %c0_i32 : i32, i32
  }
  func.func @transform_1(%arg0: i32) -> (i32, i32) {
    %c0_i32 = arith.constant 0 : i32
    %c0_i32_0 = arith.constant 0 : i32
    return %arg0, %c0_i32 : i32, i32
  }
  func.func @transform_2(%arg0: i32) -> (i32, i32) {
    %c0_i32 = arith.constant 0 : i32
    %c0_i32_0 = arith.constant 0 : i32
    %c0_i32_1 = arith.constant 0 : i32
    return %c0_i32, %c0_i32_0 : i32, i32
  }
  func.func @transform_3(%arg0: i32) -> (i32, i32) {
    %c0_i32 = arith.constant 0 : i32
    %c0_i32_0 = arith.constant 0 : i32
    %c0_i32_1 = arith.constant 0 : i32
    return %c0_i32, %c0_i32_0 : i32, i32
  }
  func.func @transform_4(%arg0: i32) -> (i32, i32) {
    %c0_i32 = arith.constant 0 : i32
    %c0_i32_0 = arith.constant 0 : i32
    %c0_i32_1 = arith.constant 0 : i32
    return %c0_i32, %c0_i32_0 : i32, i32
  }
  func.func @transform_5(%arg0: i32) -> (i32, i32) {
    %c0_i32 = arith.constant 0 : i32
    %c0_i32_0 = arith.constant 0 : i32
    %c0_i32_1 = arith.constant 0 : i32
    return %c0_i32, %c0_i32_0 : i32, i32
  }
  func.func @transform_6(%arg0: i32) -> (i32, i32) {
    %c0_i32 = arith.constant 0 : i32
    %c0_i32_0 = arith.constant 0 : i32
    %c0_i32_1 = arith.constant 0 : i32
    return %c0_i32, %c0_i32_0 : i32, i32
  }
  func.func @transform_7(%arg0: i32) -> (i32, i32) {
    %c0_i32 = arith.constant 0 : i32
    %c0_i32_0 = arith.constant 0 : i32
    %c0_i32_1 = arith.constant 0 : i32
    return %c0_i32, %c0_i32_0 : i32, i32
  }
  func.func @transform_8(%arg0: i32) -> (i32, i32) {
    %c0_i32 = arith.constant 0 : i32
    %c0_i32_0 = arith.constant 0 : i32
    %c0_i32_1 = arith.constant 0 : i32
    return %c0_i32, %c0_i32_0 : i32, i32
  }
  func.func @transform_9(%arg0: i32) -> (i32, i32) {
    %c0_i32 = arith.constant 0 : i32
    %c0_i32_0 = arith.constant 0 : i32
    %c0_i32_1 = arith.constant 0 : i32
    return %c0_i32, %c0_i32_0 : i32, i32
  }
  func.func @transform_10(%arg0: i32) -> (i32, i32) {
    %c0_i32 = arith.constant 0 : i32
    %c0_i32_0 = arith.constant 0 : i32
    return %arg0, %c0_i32 : i32, i32
  }
  func.func @transform_11(%arg0: i32) -> (i32, i32, i32) {
    %c0_i32 = arith.constant 0 : i32
    %c0_i32_0 = arith.constant 0 : i32
    %c0_i32_1 = arith.constant 0 : i32
    return %c0_i32, %arg0, %c0_i32_0 : i32, i32, i32
  }
  func.func @transform_12(%arg0: i32) -> (i32, i32, i32) {
    %c0_i32 = arith.constant 0 : i32
    %c0_i32_0 = arith.constant 0 : i32
    %c0_i32_1 = arith.constant 0 : i32
    return %c0_i32, %arg0, %c0_i32_0 : i32, i32, i32
  }
}

</mosaic_0001>

<llo_original>
// kernel: tpu_custom_call.1
$region0: #{tpu_custom_call.1}
  #allocation0 [shape = 'u32[]', space=smem, size = 0x4, offset = 0x4, fixed_abs, tag = 'smem constant byte address 0x4 - core index']
  #allocation1 [shape = 'u32[144,128]{1,0:T(1,128)}', space=vmem, size = 0x12000, scoped, tag = 'internal scratch']
  #allocation2 [shape = 'f32[1,1]{1,0:T(1,128)S(1)}', space=vmem, size = 0x200, scoped, tag = 'scoped memory for tpu_custom_call.1']
  %s0 = inlined_call_operand.vmem [shape: f32[2,16], index: 0, kind: input, shape index: {}]
  %s1 = inlined_call_operand.hbm [shape: f32[2,4], index: 1, kind: input, shape index: {}]
  %s2 = inlined_call_operand.hbm [shape: bf16[16,512], index: 2, kind: input, shape index: {}]
  %s3 = inlined_call_operand.vmem [shape: f32[1,512], index: 3, kind: input, shape index: {}]
  %s4 = inlined_call_operand.hbm [shape: bf16[132,256], index: 4, kind: input, shape index: {}]
  %s5 = inlined_call_operand.vmem [shape: f32[1,256], index: 5, kind: input, shape index: {}]
  %s6 = inlined_call_operand.hbm [shape: bf16[256,256], index: 6, kind: input, shape index: {}]
  %s7 = inlined_call_operand.vmem [shape: f32[1,256], index: 7, kind: input, shape index: {}]
  %s8 = inlined_call_operand.vmem [shape: f32[1,256], index: 8, kind: input, shape index: {}]
  %s9 = inlined_call_operand.<no memory space> [shape: f32[1,1], index: 9, kind: input, shape index: {}]
  %s10 = inlined_call_operand.vmem [shape: f32[2,1], index: 10, kind: output, shape index: {0}]
  %s11 = inlined_call_operand.hbm [shape: f32[1,2,128], index: 11, kind: output, shape index: {1}]
  %s12 = inlined_call_operand.hbm [shape: f32[1,2,128], index: 12, kind: output, shape index: {2}]
  %13 = xla_tuple %s10, %s11, %s12
  %s14 = sld [smem:[#allocation0]]
  $region82: #{tpu_custom_call.1} parent=0
    _
  %s16 = ssub.s32 1, %s14
  %s17 = scalar_select 0, %s16, %s14
  %v18 = vstv %s9
  %19 = vst [vmem:[#allocation2] sm:$0x1] %v18
  $region1: #{tpu_custom_call.1} parent=0
    #allocation3 [shape = 'u8[1024]{0}', space=vmem, size = 0x400, scoped, tag = 'input window, operand 1, single buffered']
    #allocation4 [shape = 's32[1]{0}', space=sflag, size = 0x4, scoped, tag = 'scoped memory for tpu_custom_call.1']
    #allocation5 [shape = 's32[1]{0}', space=sflag, size = 0x4, scoped, tag = 'scoped memory for tpu_custom_call.1']
    #allocation6 [shape = 'u8[16384]{0}', space=vmem, size = 0x4000, scoped, tag = 'input window, operand 2, single buffered']
    #allocation7 [shape = 's32[1]{0}', space=sflag, size = 0x4, scoped, tag = 'scoped memory for tpu_custom_call.1']
    #allocation8 [shape = 'u8[69632]{0}', space=vmem, size = 0x11000, scoped, tag = 'input window, operand 4, single buffered']
    #allocation9 [shape = 'u8[131072]{0}', space=vmem, size = 0x20000, scoped, tag = 'input window, operand 6, single buffered']
    #allocation10 [shape = 's32[1]{0}', space=sflag, size = 0x4, scoped, tag = 'scoped memory for tpu_custom_call.1']
    #allocation11 [shape = 'u8[1024]{0}', space=vmem, size = 0x400, scoped, tag = 'output window, operand 1, single buffered']
    #allocation12 [shape = 'u8[1024]{0}', space=vmem, size = 0x400, scoped, tag = 'output window, operand 2, single buffered']
    #allocation13 [shape = 's32[1]{0}', space=sflag, size = 0x4, scoped, tag = 'scoped memory for tpu_custom_call.1']
    %20 = vsyncpa [#allocation4], 0
    %21 = vsyncpa [#allocation7], 0
    %22 = vsyncpa [#allocation10], 0
    %23 = vsyncpa [#allocation5], 0
    %24 = vsyncpa [#allocation13], 0
    // Predicated region
    $region2: #{tpu_custom_call.1} parent=1 // pred_check
      _
    $region3: #{tpu_custom_call.1} parent=1 // pred_check_branch
      %26 = sbr.rel (0) target = $region5
    $region4: #{tpu_custom_call.1} parent=1 // pred_region
      _
    $region5: #{tpu_custom_call.1} parent=1 // pred_fallthru
      _
    // Predicated region
    $region6: #{tpu_custom_call.1} parent=1 // pred_check
      _
    $region7: #{tpu_custom_call.1} parent=1 // pred_check_branch
      %28 = sbr.rel (0) target = $region9
    $region8: #{tpu_custom_call.1} parent=1 // pred_region
      %s30 = ssub.s32 32, 32
      %31 = vsyncadd [#allocation4], %s30
      %s33 = sshll.u32 [#allocation3], 4
      %s34 = int_to_ptr.vmem [resolvable:$true] %s33
      %36 = dma.hbm_to_vmem [thread:$0]  %s1, 32, %s34, [#allocation4]
    $region9: #{tpu_custom_call.1} parent=1 // pred_fallthru
      _
    // Predicated region
    $region10: #{tpu_custom_call.1} parent=1 // pred_check
      _
    $region11: #{tpu_custom_call.1} parent=1 // pred_check_branch
      %38 = sbr.rel (0) target = $region13
    $region12: #{tpu_custom_call.1} parent=1 // pred_region
      %s40 = ssub.s32 512, 512
      %41 = vsyncadd [#allocation7], %s40
      %s42 = sshll.u32 [#allocation6], 4
      %s43 = int_to_ptr.vmem [resolvable:$true] %s42
      %48 = dma.hbm_to_vmem [thread:$0]  %s2, 512, %s43, [#allocation7], 256, 256, 16
    $region13: #{tpu_custom_call.1} parent=1 // pred_fallthru
      _
    // Predicated region
    $region14: #{tpu_custom_call.1} parent=1 // pred_check
      _
    $region15: #{tpu_custom_call.1} parent=1 // pred_check_branch
      %50 = sbr.rel (0) target = $region17
    $region16: #{tpu_custom_call.1} parent=1 // pred_region
      _
    $region17: #{tpu_custom_call.1} parent=1 // pred_fallthru
      _
    // Predicated region
    $region18: #{tpu_custom_call.1} parent=1 // pred_check
      _
    $region19: #{tpu_custom_call.1} parent=1 // pred_check_branch
      %52 = sbr.rel (0) target = $region21
    $region20: #{tpu_custom_call.1} parent=1 // pred_region
      %s54 = ssub.s32 2176, 2176
      %55 = vsyncadd [#allocation7], %s54
      %s56 = sshll.u32 [#allocation8], 4
      %s57 = int_to_ptr.vmem [resolvable:$true] %s56
      %62 = dma.hbm_to_vmem [thread:$0]  %s4, 2176, %s57, [#allocation7], 128, 128, 8
    $region21: #{tpu_custom_call.1} parent=1 // pred_fallthru
      _
    // Predicated region
    $region22: #{tpu_custom_call.1} parent=1 // pred_check
      _
    $region23: #{tpu_custom_call.1} parent=1 // pred_check_branch
      %64 = sbr.rel (0) target = $region25
    $region24: #{tpu_custom_call.1} parent=1 // pred_region
      _
    $region25: #{tpu_custom_call.1} parent=1 // pred_fallthru
      _
    // Predicated region
    $region26: #{tpu_custom_call.1} parent=1 // pred_check
      _
    $region27: #{tpu_custom_call.1} parent=1 // pred_check_branch
      %66 = sbr.rel (0) target = $region29
    $region28: #{tpu_custom_call.1} parent=1 // pred_region
      %s68 = ssub.s32 4096, 4096
      %69 = vsyncadd [#allocation10], %s68
      %s70 = sshll.u32 [#allocation9], 4
      %s71 = int_to_ptr.vmem [resolvable:$true] %s70
      %76 = dma.hbm_to_vmem [thread:$0]  %s6, 4096, %s71, [#allocation10], 128, 128, 8
    $region29: #{tpu_custom_call.1} parent=1 // pred_fallthru
      _
    // Predicated region
    $region30: #{tpu_custom_call.1} parent=1 // pred_check
      _
    $region31: #{tpu_custom_call.1} parent=1 // pred_check_branch
      %78 = sbr.rel (0) target = $region33
    $region32: #{tpu_custom_call.1} parent=1 // pred_region
      _
    $region33: #{tpu_custom_call.1} parent=1 // pred_fallthru
      _
    // Predicated region
    $region34: #{tpu_custom_call.1} parent=1 // pred_check
      _
    $region35: #{tpu_custom_call.1} parent=1 // pred_check_branch
      %80 = sbr.rel (0) target = $region37
    $region36: #{tpu_custom_call.1} parent=1 // pred_region
      _
    $region37: #{tpu_custom_call.1} parent=1 // pred_fallthru
      _
    // Predicated region
    $region38: #{tpu_custom_call.1} parent=1 // pred_check
      _
    $region39: #{tpu_custom_call.1} parent=1 // pred_check_branch
      %82 = sbr.rel (0) target = $region41
    $region40: #{tpu_custom_call.1} parent=1 // pred_region
      _
    $region41: #{tpu_custom_call.1} parent=1 // pred_fallthru
      _
    // Predicated region
    $region42: #{tpu_custom_call.1} parent=1 // pred_check
      _
    $region43: #{tpu_custom_call.1} parent=1 // pred_check_branch
      %84 = sbr.rel (0) target = $region45
    $region44: #{tpu_custom_call.1} parent=1 // pred_region
      %85 = dma.done [#allocation4], 32
    $region45: #{tpu_custom_call.1} parent=1 // pred_fallthru
      _
    // Predicated region
    $region46: #{tpu_custom_call.1} parent=1 // pred_check
      _
    $region47: #{tpu_custom_call.1} parent=1 // pred_check_branch
      %87 = sbr.rel (0) target = $region49
    $region48: #{tpu_custom_call.1} parent=1 // pred_region
      %88 = dma.done [#allocation7], 512
    $region49: #{tpu_custom_call.1} parent=1 // pred_fallthru
      _
    // Predicated region
    $region50: #{tpu_custom_call.1} parent=1 // pred_check
      _
    $region51: #{tpu_custom_call.1} parent=1 // pred_check_branch
      %90 = sbr.rel (0) target = $region53
    $region52: #{tpu_custom_call.1} parent=1 // pred_region
      %91 = dma.done [#allocation7], 2176
    $region53: #{tpu_custom_call.1} parent=1 // pred_fallthru
      _
    // Predicated region
    $region54: #{tpu_custom_call.1} parent=1 // pred_check
      _
    $region55: #{tpu_custom_call.1} parent=1 // pred_check_branch
      %93 = sbr.rel (0) target = $region57
    $region56: #{tpu_custom_call.1} parent=1 // pred_region
      %94 = dma.done [#allocation10], 4096
    $region57: #{tpu_custom_call.1} parent=1 // pred_fallthru
      _
    %v96 = vld [vmem:[%s0] sm:$0x3]
    %v97 = vpack.c.bf16 %v96, %v96
    %v98 = vld [vmem:[#allocation6] sm:$0xff]
    %v99 = vld [vmem:[#allocation6 + $0x8] sm:$0xff]
    %v100 = vld [vmem:[#allocation6 + $0x10] sm:$0xff]
    %v101 = vld [vmem:[#allocation6 + $0x18] sm:$0xff]
    %v102 = vld [vmem:[%s3] sm:$0xf]
    %v104 = vlaneseq
    %v105 = vshrl.u32 %v104, 7
    %v106 = vsub.s32 0, %v105
    %v107 = vrot.slane %v102, %v106
    %v108 = vlaneseq
    %v109 = vshrl.u32 %v108, 7
    %v110 = vsub.s32 2, %v109
    %v111 = vrot.slane %v102, %v110
    %v112 = vlaneseq
    %v113 = vshrl.u32 %v112, 7
    %v114 = vsub.s32 3, %v113
    %v115 = vrot.slane %v102, %v114
    %v123 = vunpack.c.l.b16 %v98
    %v124 = vunpack.c.h.b16 %v98
    %v125 = vunpack.c.l.b16 %v99
    %v126 = vunpack.c.h.b16 %v99
    %v127 = vunpack.c.l.b16 %v100
    %v128 = vunpack.c.h.b16 %v100
    %v129 = vunpack.c.l.b16 %v101
    %v130 = vunpack.c.h.b16 %v101
    %v131 = vpack.c.b16 %v127, %v123
    %v132 = vpack.c.b16 %v128, %v124
    %v133 = vpack.c.b16 %v129, %v125
    %v134 = vpack.c.b16 %v130, %v126
    %vm139 = vcmask 130048
    %v141 = vsel %vm139, %v97, 0
    %143 = vmatprep.subr.bf16.mxu0 %v132
    %144 = vmatpush1.bf16.msra.mxu0 %v131
    %145 = vmatprep.subr.bf16.mxu0 0
    %146 = vmatpush1.bf16.msra.mxu0 0
    %147 = vmatprep.subr.bf16.mxu0 0
    %148 = vmatpush1.bf16.msra.mxu0 0
    %149 = vmatprep.subr.bf16.mxu0 0
    %150 = vmatpush1.bf16.msra.mxu0 0
    %151 = vmatprep.subr.bf16.mxu0 0
    %152 = vmatpush1.bf16.msra.mxu0 0
    %153 = vmatprep.subr.bf16.mxu0 0
    %154 = vmatpush1.bf16.msra.mxu0 0
    %155 = vmatprep.subr.bf16.mxu0 0
    %156 = vmatpush1.bf16.msra.mxu0 0
    %157 = vmatprep.subr.bf16.mxu0 0
    %158 = vmatpush1.bf16.msra.mxu0 0
    %159 = vmatprep.subr.bf16.mxu0 0
    %160 = vmatpush1.bf16.msra.mxu0 0
    %161 = vmatprep.subr.bf16.mxu0 0
    %162 = vmatpush1.bf16.msra.mxu0 0
    %163 = vmatprep.subr.bf16.mxu0 0
    %164 = vmatpush1.bf16.msra.mxu0 0
    %165 = vmatprep.subr.bf16.mxu0 0
    %166 = vmatpush1.bf16.msra.mxu0 0
    %167 = vmatprep.subr.bf16.mxu0 0
    %168 = vmatpush1.bf16.msra.mxu0 0
    %169 = vmatprep.subr.bf16.mxu0 0
    %170 = vmatpush1.bf16.msra.mxu0 0
    %171 = vmatprep.subr.bf16.mxu0 0
    %172 = vmatpush1.bf16.msra.mxu0 0
    %173 = vmatprep.subr.bf16.mxu0 0
    %174 = vmatpush1.bf16.msra.mxu0 0
    %175 = vmatprep.mubr.bf16.mxu0 0
    %176 = vmatmul.mubr.bf16.gmra.mrb[0].mxu0 %v141
    %v177 = vpop.f32.mrb[0].mxu0
    %v178 = vadd.f32 %v107, %v177
    %v179 = vpop.f32.mrb[0].mxu0
    %v180 = vpop.f32.mrb[0].mxu0
    %v181 = vpop.f32.mrb[0].mxu0
    %182 = vdwg.mxu0
    %183 = vmatprep.subr.bf16.mxu0 %v134
    %184 = vmatpush1.bf16.msra.mxu0 %v133
    %185 = vmatprep.subr.bf16.mxu0 0
    %186 = vmatpush1.bf16.msra.mxu0 0
    %187 = vmatprep.subr.bf16.mxu0 0
    %188 = vmatpush1.bf16.msra.mxu0 0
    %189 = vmatprep.subr.bf16.mxu0 0
    %190 = vmatpush1.bf16.msra.mxu0 0
    %191 = vmatprep.subr.bf16.mxu0 0
    %192 = vmatpush1.bf16.msra.mxu0 0
    %193 = vmatprep.subr.bf16.mxu0 0
    %194 = vmatpush1.bf16.msra.mxu0 0
    %195 = vmatprep.subr.bf16.mxu0 0
    %196 = vmatpush1.bf16.msra.mxu0 0
    %197 = vmatprep.subr.bf16.mxu0 0
    %198 = vmatpush1.bf16.msra.mxu0 0
    %199 = vmatprep.subr.bf16.mxu0 0
    %200 = vmatpush1.bf16.msra.mxu0 0
    %201 = vmatprep.subr.bf16.mxu0 0
    %202 = vmatpush1.bf16.msra.mxu0 0
    %203 = vmatprep.subr.bf16.mxu0 0
    %204 = vmatpush1.bf16.msra.mxu0 0
    %205 = vmatprep.subr.bf16.mxu0 0
    %206 = vmatpush1.bf16.msra.mxu0 0
    %207 = vmatprep.subr.bf16.mxu0 0
    %208 = vmatpush1.bf16.msra.mxu0 0
    %209 = vmatprep.subr.bf16.mxu0 0
    %210 = vmatpush1.bf16.msra.mxu0 0
    %211 = vmatprep.subr.bf16.mxu0 0
    %212 = vmatpush1.bf16.msra.mxu0 0
    %213 = vmatprep.subr.bf16.mxu0 0
    %214 = vmatpush1.bf16.msra.mxu0 0
    %215 = vmatprep.mubr.bf16.mxu0 0
    %216 = vmatmul.mubr.bf16.gmra.mrb[0].mxu0 %v141
    %v217 = vpop.f32.mrb[0].mxu0
    %v218 = vadd.f32 %v111, %v217
    %v219 = vpop.f32.mrb[0].mxu0
    %v220 = vadd.f32 %v115, %v219
    %v221 = vpop.f32.mrb[0].mxu0
    %v222 = vpop.f32.mrb[0].mxu0
    %223 = vdwg.mxu0
    %v224 = vxor.u32 %v178, 2147483648
    %v225 = vmul.f32 %v224, 1.442695
    %v226 = vpow.pop %v225
    %v227 = vadd.f32 %v226, 1.0
    %v228 = vrcp.pop %v227
    %v229 = vmul.f32 1.0, %v228
    %v230 = vtanh.pop %v218
    %v231 = vxor.u32 %v220, 2147483648
    %v232 = vmul.f32 %v231, 1.442695
    %v233 = vpow.pop %v232
    %v234 = vadd.f32 %v233, 1.0
    %v235 = vrcp.pop %v234
    %v236 = vmul.f32 1.0, %v235
    %v237 = vmul.f32 %v229, %v230
    %v238 = vtanh.pop %v237
    %v239 = vmul.f32 %v236, %v238
    %240 = vst [vmem:[#allocation11] sm:$0x3] %v239
    %241 = vst [vmem:[#allocation12] sm:$0x3] %v237
    %v242 = vpack.c.bf16 %v239, %v239
    %v243 = vld [vmem:[#allocation3] sm:$0x3]
    %v244 = vpack.c.bf16 %v243, %v243
    %v245 = vld [vmem:[#allocation8] sm:$0xff]
    %v246 = vld [vmem:[#allocation8 + $0x8] sm:$0xff]
    %v247 = vld [vmem:[#allocation8 + $0x10] sm:$0xff]
    %v248 = vld [vmem:[#allocation8 + $0x18] sm:$0xff]
    %v249 = vld [vmem:[#allocation8 + $0x20] sm:$0xff]
    %v250 = vld [vmem:[#allocation8 + $0x28] sm:$0xff]
    %v251 = vld [vmem:[#allocation8 + $0x30] sm:$0xff]
    %v252 = vld [vmem:[#allocation8 + $0x38] sm:$0xff]
    %v253 = vld [vmem:[#allocation8 + $0x40] sm:$0xff]
    %v254 = vld [vmem:[#allocation8 + $0x48] sm:$0xff]
    %v255 = vld [vmem:[#allocation8 + $0x50] sm:$0xff]
    %v256 = vld [vmem:[#allocation8 + $0x58] sm:$0xff]
    %v257 = vld [vmem:[#allocation8 + $0x60] sm:$0xff]
    %v258 = vld [vmem:[#allocation8 + $0x68] sm:$0xff]
    %v259 = vld [vmem:[#allocation8 + $0x70] sm:$0xff]
    %v260 = vld [vmem:[#allocation8 + $0x78] sm:$0xff]
    %v261 = vld [vmem:[#allocation8 + $0x80] sm:$0x33]
    %v262 = vld [vmem:[%s5] sm:$0x3]
    %v264 = vlaneseq
    %v265 = vshrl.u32 %v264, 7
    %v266 = vsub.s32 0, %v265
    %v267 = vrot.slane %v262, %v266
    %v268 = vlaneseq
    %v269 = vshrl.u32 %v268, 7
    %v270 = vsub.s32 1, %v269
    %v271 = vrot.slane %v262, %v270
    %v291 = vunpack.c.l.b16 %v245
    %v292 = vunpack.c.h.b16 %v245
    %v293 = vunpack.c.l.b16 %v246
    %v294 = vunpack.c.h.b16 %v246
    %v295 = vunpack.c.l.b16 %v247
    %v296 = vunpack.c.h.b16 %v247
    %v297 = vunpack.c.l.b16 %v248
    %v298 = vunpack.c.h.b16 %v248
    %v299 = vunpack.c.l.b16 %v249
    %v300 = vunpack.c.h.b16 %v249
    %v301 = vunpack.c.l.b16 %v250
    %v302 = vunpack.c.h.b16 %v250
    %v303 = vunpack.c.l.b16 %v251
    %v304 = vunpack.c.h.b16 %v251
    %v305 = vunpack.c.l.b16 %v252
    %v306 = vunpack.c.h.b16 %v252
    %v307 = vunpack.c.l.b16 %v253
    %v308 = vunpack.c.h.b16 %v253
    %v309 = vunpack.c.l.b16 %v254
    %v310 = vunpack.c.h.b16 %v254
    %v311 = vunpack.c.l.b16 %v255
    %v312 = vunpack.c.h.b16 %v255
    %v313 = vunpack.c.l.b16 %v256
    %v314 = vunpack.c.h.b16 %v256
    %v315 = vunpack.c.l.b16 %v257
    %v316 = vunpack.c.h.b16 %v257
    %v317 = vunpack.c.l.b16 %v258
    %v318 = vunpack.c.h.b16 %v258
    %v319 = vunpack.c.l.b16 %v259
    %v320 = vunpack.c.h.b16 %v259
    %v321 = vunpack.c.l.b16 %v260
    %v322 = vunpack.c.h.b16 %v260
    %v323 = vunpack.c.l.b16 %v261
    %v324 = vunpack.c.h.b16 %v261
    %v325 = vpack.c.b16 %v293, %v291
    %v326 = vpack.c.b16 %v294, %v292
    %v327 = vpack.c.b16 %v297, %v295
    %v328 = vpack.c.b16 %v298, %v296
    %v329 = vpack.c.b16 %v301, %v299
    %v330 = vpack.c.b16 %v302, %v300
    %v331 = vpack.c.b16 %v305, %v303
    %v332 = vpack.c.b16 %v306, %v304
    %v333 = vpack.c.b16 %v309, %v307
    %v334 = vpack.c.b16 %v310, %v308
    %v335 = vpack.c.b16 %v313, %v311
    %v336 = vpack.c.b16 %v314, %v312
    %v337 = vpack.c.b16 %v317, %v315
    %v338 = vpack.c.b16 %v318, %v316
    %v339 = vpack.c.b16 %v321, %v319
    %v340 = vpack.c.b16 %v322, %v320
    %v341 = vpack.c.b16 %v323, %v323
    %v342 = vpack.c.b16 %v324, %v324
    %vm359 = vcmask 31744
    %v361 = vsel %vm359, %v244, 0
    %vm363 = vcmask 1041408
    %v365 = vsel %vm363, %v341, 0
    %v368 = vsel %vm363, %v342, 0
    %370 = vmatprep.subr.bf16.mxu0 %v326
    %371 = vmatpush1.bf16.msra.mxu0 %v325
    %372 = vmatprep.subr.bf16.mxu0 %v328
    %373 = vmatpush1.bf16.msra.mxu0 %v327
    %374 = vmatprep.subr.bf16.mxu0 %v330
    %375 = vmatpush1.bf16.msra.mxu0 %v329
    %376 = vmatprep.subr.bf16.mxu0 %v332
    %377 = vmatpush1.bf16.msra.mxu0 %v331
    %378 = vmatprep.subr.bf16.mxu0 %v334
    %379 = vmatpush1.bf16.msra.mxu0 %v333
    %380 = vmatprep.subr.bf16.mxu0 %v336
    %381 = vmatpush1.bf16.msra.mxu0 %v335
    %382 = vmatprep.subr.bf16.mxu0 %v338
    %383 = vmatpush1.bf16.msra.mxu0 %v337
    %384 = vmatprep.subr.bf16.mxu0 %v340
    %385 = vmatpush1.bf16.msra.mxu0 %v339
    %386 = vmatprep.subr.bf16.mxu0 %v368
    %387 = vmatpush1.bf16.msra.mxu0 %v365
    %388 = vmatprep.subr.bf16.mxu0 0
    %389 = vmatpush1.bf16.msra.mxu0 0
    %390 = vmatprep.subr.bf16.mxu0 0
    %391 = vmatpush1.bf16.msra.mxu0 0
    %392 = vmatprep.subr.bf16.mxu0 0
    %393 = vmatpush1.bf16.msra.mxu0 0
    %394 = vmatprep.subr.bf16.mxu0 0
    %395 = vmatpush1.bf16.msra.mxu0 0
    %396 = vmatprep.subr.bf16.mxu0 0
    %397 = vmatpush1.bf16.msra.mxu0 0
    %398 = vmatprep.subr.bf16.mxu0 0
    %399 = vmatpush1.bf16.msra.mxu0 0
    %400 = vmatprep.subr.bf16.mxu0 0
    %401 = vmatpush1.bf16.msra.mxu0 0
    %402 = vmatprep.mubr.bf16.mxu0 %v361
    %403 = vmatmul.mubr.bf16.gmra.mrb[0].mxu0 %v242
    %v404 = vpop.f32.mrb[0].mxu0
    %v405 = vadd.f32 %v267, %v404
    %v406 = vpop.f32.mrb[0].mxu0
    %v407 = vadd.f32 %v271, %v406
    %v408 = vpop.f32.mrb[0].mxu0
    %v409 = vpop.f32.mrb[0].mxu0
    %410 = vdwg.mxu0
    %v411 = vmax.f32 %v405, 0.0
    %v412 = vmax.f32 %v407, 0.0
    %v413 = vpack.c.bf16 %v411, %v411
    %v414 = vpack.c.bf16 %v412, %v412
    %v415 = vld [vmem:[#allocation9] sm:$0xff]
    %v416 = vld [vmem:[#allocation9 + $0x8] sm:$0xff]
    %v417 = vld [vmem:[#allocation9 + $0x10] sm:$0xff]
    %v418 = vld [vmem:[#allocation9 + $0x18] sm:$0xff]
    %v419 = vld [vmem:[#allocation9 + $0x20] sm:$0xff]
    %v420 = vld [vmem:[#allocation9 + $0x28] sm:$0xff]
    %v421 = vld [vmem:[#allocation9 + $0x30] sm:$0xff]
    %v422 = vld [vmem:[#allocation9 + $0x38] sm:$0xff]
    %v423 = vld [vmem:[#allocation9 + $0x40] sm:$0xff]
    %v424 = vld [vmem:[#allocation9 + $0x48] sm:$0xff]
    %v425 = vld [vmem:[#allocation9 + $0x50] sm:$0xff]
    %v426 = vld [vmem:[#allocation9 + $0x58] sm:$0xff]
    %v427 = vld [vmem:[#allocation9 + $0x60] sm:$0xff]
    %v428 = vld [vmem:[#allocation9 + $0x68] sm:$0xff]
    %v429 = vld [vmem:[#allocation9 + $0x70] sm:$0xff]
    %v430 = vld [vmem:[#allocation9 + $0x78] sm:$0xff]
    %v431 = vld [vmem:[#allocation9 + $0x80] sm:$0xff]
    %v432 = vld [vmem:[#allocation9 + $0x88] sm:$0xff]
    %v433 = vld [vmem:[#allocation9 + $0x90] sm:$0xff]
    %v434 = vld [vmem:[#allocation9 + $0x98] sm:$0xff]
    %v435 = vld [vmem:[#allocation9 + $0xa0] sm:$0xff]
    %v436 = vld [vmem:[#allocation9 + $0xa8] sm:$0xff]
    %v437 = vld [vmem:[#allocation9 + $0xb0] sm:$0xff]
    %v438 = vld [vmem:[#allocation9 + $0xb8] sm:$0xff]
    %v439 = vld [vmem:[#allocation9 + $0xc0] sm:$0xff]
    %v440 = vld [vmem:[#allocation9 + $0xc8] sm:$0xff]
    %v441 = vld [vmem:[#allocation9 + $0xd0] sm:$0xff]
    %v442 = vld [vmem:[#allocation9 + $0xd8] sm:$0xff]
    %v443 = vld [vmem:[#allocation9 + $0xe0] sm:$0xff]
    %v444 = vld [vmem:[#allocation9 + $0xe8] sm:$0xff]
    %v445 = vld [vmem:[#allocation9 + $0xf0] sm:$0xff]
    %v446 = vld [vmem:[#allocation9 + $0xf8] sm:$0xff]
    %v447 = vld [vmem:[%s7] sm:$0x3]
    %v449 = vlaneseq
    %v450 = vshrl.u32 %v449, 7
    %v451 = vsub.s32 0, %v450
    %v452 = vrot.slane %v447, %v451
    %v453 = vlaneseq
    %v454 = vshrl.u32 %v453, 7
    %v455 = vsub.s32 1, %v454
    %v456 = vrot.slane %v447, %v455
    %v491 = vunpack.c.l.b16 %v415
    %v492 = vunpack.c.h.b16 %v415
    %v493 = vunpack.c.l.b16 %v416
    %v494 = vunpack.c.h.b16 %v416
    %v495 = vunpack.c.l.b16 %v417
    %v496 = vunpack.c.h.b16 %v417
    %v497 = vunpack.c.l.b16 %v418
    %v498 = vunpack.c.h.b16 %v418
    %v499 = vunpack.c.l.b16 %v419
    %v500 = vunpack.c.h.b16 %v419
    %v501 = vunpack.c.l.b16 %v420
    %v502 = vunpack.c.h.b16 %v420
    %v503 = vunpack.c.l.b16 %v421
    %v504 = vunpack.c.h.b16 %v421
    %v505 = vunpack.c.l.b16 %v422
    %v506 = vunpack.c.h.b16 %v422
    %v507 = vunpack.c.l.b16 %v423
    %v508 = vunpack.c.h.b16 %v423
    %v509 = vunpack.c.l.b16 %v424
    %v510 = vunpack.c.h.b16 %v424
    %v511 = vunpack.c.l.b16 %v425
    %v512 = vunpack.c.h.b16 %v425
    %v513 = vunpack.c.l.b16 %v426
    %v514 = vunpack.c.h.b16 %v426
    %v515 = vunpack.c.l.b16 %v427
    %v516 = vunpack.c.h.b16 %v427
    %v517 = vunpack.c.l.b16 %v428
    %v518 = vunpack.c.h.b16 %v428
    %v519 = vunpack.c.l.b16 %v429
    %v520 = vunpack.c.h.b16 %v429
    %v521 = vunpack.c.l.b16 %v430
    %v522 = vunpack.c.h.b16 %v430
    %v523 = vunpack.c.l.b16 %v431
    %v524 = vunpack.c.h.b16 %v431
    %v525 = vunpack.c.l.b16 %v432
    %v526 = vunpack.c.h.b16 %v432
    %v527 = vunpack.c.l.b16 %v433
    %v528 = vunpack.c.h.b16 %v433
    %v529 = vunpack.c.l.b16 %v434
    %v530 = vunpack.c.h.b16 %v434
    %v531 = vunpack.c.l.b16 %v435
    %v532 = vunpack.c.h.b16 %v435
    %v533 = vunpack.c.l.b16 %v436
    %v534 = vunpack.c.h.b16 %v436
    %v535 = vunpack.c.l.b16 %v437
    %v536 = vunpack.c.h.b16 %v437
    %v537 = vunpack.c.l.b16 %v438
    %v538 = vunpack.c.h.b16 %v438
    %v539 = vunpack.c.l.b16 %v439
    %v540 = vunpack.c.h.b16 %v439
    %v541 = vunpack.c.l.b16 %v440
    %v542 = vunpack.c.h.b16 %v440
    %v543 = vunpack.c.l.b16 %v441
    %v544 = vunpack.c.h.b16 %v441
    %v545 = vunpack.c.l.b16 %v442
    %v546 = vunpack.c.h.b16 %v442
    %v547 = vunpack.c.l.b16 %v443
    %v548 = vunpack.c.h.b16 %v443
    %v549 = vunpack.c.l.b16 %v444
    %v550 = vunpack.c.h.b16 %v444
    %v551 = vunpack.c.l.b16 %v445
    %v552 = vunpack.c.h.b16 %v445
    %v553 = vunpack.c.l.b16 %v446
    %v554 = vunpack.c.h.b16 %v446
    %v555 = vpack.c.b16 %v493, %v491
    %v556 = vpack.c.b16 %v494, %v492
    %v557 = vpack.c.b16 %v497, %v495
    %v558 = vpack.c.b16 %v498, %v496
    %v559 = vpack.c.b16 %v501, %v499
    %v560 = vpack.c.b16 %v502, %v500
    %v561 = vpack.c.b16 %v505, %v503
    %v562 = vpack.c.b16 %v506, %v504
    %v563 = vpack.c.b16 %v509, %v507
    %v564 = vpack.c.b16 %v510, %v508
    %v565 = vpack.c.b16 %v513, %v511
    %v566 = vpack.c.b16 %v514, %v512
    %v567 = vpack.c.b16 %v517, %v515
    %v568 = vpack.c.b16 %v518, %v516
    %v569 = vpack.c.b16 %v521, %v519
    %v570 = vpack.c.b16 %v522, %v520
    %v571 = vpack.c.b16 %v525, %v523
    %v572 = vpack.c.b16 %v526, %v524
    %v573 = vpack.c.b16 %v529, %v527
    %v574 = vpack.c.b16 %v530, %v528
    %v575 = vpack.c.b16 %v533, %v531
    %v576 = vpack.c.b16 %v534, %v532
    %v577 = vpack.c.b16 %v537, %v535
    %v578 = vpack.c.b16 %v538, %v536
    %v579 = vpack.c.b16 %v541, %v539
    %v580 = vpack.c.b16 %v542, %v540
    %v581 = vpack.c.b16 %v545, %v543
    %v582 = vpack.c.b16 %v546, %v544
    %v583 = vpack.c.b16 %v549, %v547
    %v584 = vpack.c.b16 %v550, %v548
    %v585 = vpack.c.b16 %v553, %v551
    %v586 = vpack.c.b16 %v554, %v552
    %619 = vmatprep.subr.bf16.mxu0 %v556
    %620 = vmatpush1.bf16.msra.mxu0 %v555
    %621 = vmatprep.subr.bf16.mxu0 %v558
    %622 = vmatpush1.bf16.msra.mxu0 %v557
    %623 = vmatprep.subr.bf16.mxu0 %v560
    %624 = vmatpush1.bf16.msra.mxu0 %v559
    %625 = vmatprep.subr.bf16.mxu0 %v562
    %626 = vmatpush1.bf16.msra.mxu0 %v561
    %627 = vmatprep.subr.bf16.mxu0 %v564
    %628 = vmatpush1.bf16.msra.mxu0 %v563
    %629 = vmatprep.subr.bf16.mxu0 %v566
    %630 = vmatpush1.bf16.msra.mxu0 %v565
    %631 = vmatprep.subr.bf16.mxu0 %v568
    %632 = vmatpush1.bf16.msra.mxu0 %v567
    %633 = vmatprep.subr.bf16.mxu0 %v570
    %634 = vmatpush1.bf16.msra.mxu0 %v569
    %635 = vmatprep.subr.bf16.mxu0 %v572
    %636 = vmatpush1.bf16.msra.mxu0 %v571
    %637 = vmatprep.subr.bf16.mxu0 %v574
    %638 = vmatpush1.bf16.msra.mxu0 %v573
    %639 = vmatprep.subr.bf16.mxu0 %v576
    %640 = vmatpush1.bf16.msra.mxu0 %v575
    %641 = vmatprep.subr.bf16.mxu0 %v578
    %642 = vmatpush1.bf16.msra.mxu0 %v577
    %643 = vmatprep.subr.bf16.mxu0 %v580
    %644 = vmatpush1.bf16.msra.mxu0 %v579
    %645 = vmatprep.subr.bf16.mxu0 %v582
    %646 = vmatpush1.bf16.msra.mxu0 %v581
    %647 = vmatprep.subr.bf16.mxu0 %v584
    %648 = vmatpush1.bf16.msra.mxu0 %v583
    %649 = vmatprep.subr.bf16.mxu0 %v586
    %650 = vmatpush1.bf16.msra.mxu0 %v585
    %651 = vmatprep.mubr.bf16.mxu0 %v414
    %652 = vmatmul.mubr.bf16.gmra.mrb[0].mxu0 %v413
    %v653 = vpop.f32.mrb[0].mxu0
    %v654 = vadd.f32 %v452, %v653
    %v655 = vpop.f32.mrb[0].mxu0
    %v656 = vadd.f32 %v456, %v655
    %v657 = vpop.f32.mrb[0].mxu0
    %v658 = vpop.f32.mrb[0].mxu0
    %659 = vdwg.mxu0
    %v660 = vmax.f32 %v654, 0.0
    %v661 = vmax.f32 %v656, 0.0
    %v662 = vld [vmem:[%s8] sm:$0x3]
    %v664 = vlaneseq
    %v665 = vshrl.u32 %v664, 7
    %v666 = vsub.s32 0, %v665
    %v667 = vrot.slane %v662, %v666
    %v668 = vlaneseq
    %v669 = vshrl.u32 %v668, 7
    %v670 = vsub.s32 1, %v669
    %v671 = vrot.slane %v662, %v670
    %v674 = vmul.f32 %v660, %v667
    %v675 = vmul.f32 %v661, %v671
    %v676 = vsel %vm363, %v674, 0.0
    %v677 = vsel %vm363, %v675, 0.0
    %v678 = vadd.f32 %v676, %v677
    %679 = vadd.xlane.f32.xlu0 %v678
    %v680 = vpop.xlane.xlu0 %679
    %v681 = vld [vmem:[#allocation2] sm:$0x1]
    %v683 = vlaneseq
    %v684 = vshrl.u32 %v683, 7
    %v685 = vsub.s32 0, %v684
    %v686 = vrot.slane %v681, %v685
    %v688 = vadd.f32 %v680, %v686
    %vm689 = vcmask 1024
    %690 = vst.msk [vmem:[%s10] sm:$0x3] %vm689, %v688
    // Predicated region
    $region58: #{tpu_custom_call.1} parent=1 // pred_check
      _
    $region59: #{tpu_custom_call.1} parent=1 // pred_check_branch
      %692 = sbr.rel (0) target = $region61
    $region60: #{tpu_custom_call.1} parent=1 // pred_region
      _
    $region61: #{tpu_custom_call.1} parent=1 // pred_fallthru
      _
    // Predicated region
    $region62: #{tpu_custom_call.1} parent=1 // pred_check
      _
    $region63: #{tpu_custom_call.1} parent=1 // pred_check_branch
      %694 = sbr.rel (0) target = $region65
    $region64: #{tpu_custom_call.1} parent=1 // pred_region
      %s696 = ssub.s32 32, 32
      %697 = vsyncadd [#allocation5], %s696
      %s699 = sshll.u32 [#allocation11], 4
      %s700 = int_to_ptr.vmem [resolvable:$true] %s699
      %702 = dma.vmem_to_hbm [thread:$0]  %s700, 32, %s11, [#allocation5]
    $region65: #{tpu_custom_call.1} parent=1 // pred_fallthru
      _
    // Predicated region
    $region66: #{tpu_custom_call.1} parent=1 // pred_check
      _
    $region67: #{tpu_custom_call.1} parent=1 // pred_check_branch
      %704 = sbr.rel (0) target = $region69
    $region68: #{tpu_custom_call.1} parent=1 // pred_region
      %s706 = ssub.s32 32, 32
      %707 = vsyncadd [#allocation13], %s706
      %s709 = sshll.u32 [#allocation12], 4
      %s710 = int_to_ptr.vmem [resolvable:$true] %s709
      %712 = dma.vmem_to_hbm [thread:$0]  %s710, 32, %s12, [#allocation13]
    $region69: #{tpu_custom_call.1} parent=1 // pred_fallthru
      _
    // Predicated region
    $region70: #{tpu_custom_call.1} parent=1 // pred_check
      _
    $region71: #{tpu_custom_call.1} parent=1 // pred_check_branch
      %714 = sbr.rel (0) target = $region73
    $region72: #{tpu_custom_call.1} parent=1 // pred_region
      _
    $region73: #{tpu_custom_call.1} parent=1 // pred_fallthru
      _
    // Predicated region
    $region74: #{tpu_custom_call.1} parent=1 // pred_check
      _
    $region75: #{tpu_custom_call.1} parent=1 // pred_check_branch
      %716 = sbr.rel (0) target = $region77
    $region76: #{tpu_custom_call.1} parent=1 // pred_region
      %717 = dma.done [#allocation5], 32
    $region77: #{tpu_custom_call.1} parent=1 // pred_fallthru
      _
    // Predicated region
    $region78: #{tpu_custom_call.1} parent=1 // pred_check
      _
    $region79: #{tpu_custom_call.1} parent=1 // pred_check_branch
      %719 = sbr.rel (0) target = $region81
    $region80: #{tpu_custom_call.1} parent=1 // pred_region
      %720 = dma.done [#allocation13], 32
    $region81: #{tpu_custom_call.1} parent=1 // pred_fallthru
      _
    %721 = vsyncpa [#allocation4], 1
    %722 = vsyncpa [#allocation7], 1
    %723 = vsyncpa [#allocation10], 1
    %724 = vsyncpa [#allocation5], 1
    %725 = vsyncpa [#allocation13], 1

</llo_original>
